<compile_context>
chip_gen: v5e
topology: v5e:2x2
jax: 0.10.0
libtpu: 0.0.40
codegen_flags: <defaults>
</compile_context>

<pallas_src>
import functools

import jax
import jax.numpy as jnp
from jax.experimental import pallas as pl
from jax.experimental.pallas import tpu as pltpu


def _simp_att_kernel(S, H, x_ref, w_ref, b_ref, out_ref, att_ref):
    # x_ref:(TB, S*H) in x dtype; w_ref:(1, S*H) f32 (att_weights tiled per
    # sequence step); b_ref:(1, S) f32.
    tb = x_ref.shape[0]
    x = x_ref[...]                                           # (TB, S*H)

    # e[b, s] = sum_h x[b, s, h] * w[h] -- VPU multiply + exact f32 reduce
    # (no MXU pass, so no bf16-pass precision loss for the 1-wide projection).
    xw = x.astype(jnp.float32) * w_ref[...]                  # (TB, S*H) f32
    e = jnp.sum(xw.reshape(tb, S, H), axis=-1)               # (TB, S) f32
    e = jnp.tanh(e + b_ref[...])                             # bias bcast over rows

    # Softmax over the sequence axis, f32, exact division (mem-bound: free).
    e_max = jnp.max(e, axis=-1, keepdims=True)               # (TB, 1)
    p = jnp.exp(e - e_max)                                   # (TB, S)
    denom = jnp.sum(p, axis=-1, keepdims=True)               # (TB, 1)
    att = p / denom                                          # (TB, S) f32

    # out = x * att broadcast over hidden; the big multiply stays in x dtype.
    att_rep = jnp.broadcast_to(att[:, :, None], (tb, S, H)).reshape(tb, S * H)
    out_ref[...] = (x * att_rep.astype(x.dtype)).astype(out_ref.dtype)
    att_ref[...] = att.astype(att_ref.dtype)                 # (TB, S)


def _hw_config():
    """Return (pipeline_vmem_budget_bytes, vmem_limit_bytes, two_tensorcores)."""
    try:
        vmem_bytes = int(pltpu.get_tpu_info().vmem_capacity_bytes)
    except Exception:
        # Unknown chip: conservative numbers, safe even on v7x's 64 MiB VMEM.
        return 32 << 20, 48 << 20, False
    if vmem_bytes <= (64 << 20):
        # v7x-class: 64 MiB VMEM per TensorCore, 2 TensorCores per chip.
        return 40 << 20, 56 << 20, True
    # v5e / v6e: 128 MiB physical VMEM, single TensorCore -> go big on blocks.
    return 56 << 20, 96 << 20, False


def _choose_tb(B, S, H, itemsize, pipeline_budget, two_cores):
    """Largest batch tile whose pipelined VMEM footprint fits the budget."""
    SH = S * H
    pad = -(-128 // H) if H < 128 else 1
    # Per batch-row VMEM: double-buffered x block + double-buffered out block
    # (lane-dense, unpadded) + f32 compute temporaries: xw / att_rep (flat) and
    # the (S, H)-shaped intermediates whose last dim pads up to a 128-lane tile.
    bytes_per_row = 4 * SH * itemsize + (2 + 2 * pad) * SH * 4
    # TODO(synk): for extreme S*H where even 8 rows overflow VMEM, a second
    # grid axis chunking H would be needed.
    max_tb = max(8, pipeline_budget // bytes_per_row)

    if B <= max_tb:
        if two_cores and B >= 16:
            # Two blocks so both v7x TensorCores get (nearly) equal work.
            tb = ((-(-B // 2)) + 7) // 8 * 8
        else:
            tb = B          # whole batch in one block; no padding anywhere
    else:
        tb = max(8, (max_tb // 8) * 8)
        if two_cores:
            # Keep the block count even so the two TensorCores stay balanced.
            nb = -(-B // tb)
            while nb > 1 and nb % 2 and tb > 8:
                tb -= 8
                nb = -(-B // tb)
    return tb


def simp_att_layer(x, att_weights, att_bias, return_sequence=True):
    """x: (B, S, H); att_weights: (H, 1); att_bias: (S, 1).

    Returns (out, att) with out: (B, S, H), att: (B, S, 1) when
    return_sequence=True, else sum(out, axis=1).
    """
    B, S, H = x.shape
    assert att_weights.shape == (H, 1), att_weights.shape
    assert att_bias.shape == (S, 1), att_bias.shape
    SH = S * H
    itemsize = jnp.dtype(x.dtype).itemsize

    pipeline_budget, vmem_limit, two_cores = _hw_config()
    tb = _choose_tb(B, S, H, itemsize, pipeline_budget, two_cores)
    grid = (pl.cdiv(B, tb),)   # ragged last block handled by Pallas; no jnp.pad

    x_flat = x.reshape(B, SH)                                  # metadata-only
    w_tiled = jnp.tile(att_weights.reshape(1, H).astype(jnp.float32), (1, S))
    bias = att_bias.reshape(1, S).astype(jnp.float32)

    kernel = functools.partial(_simp_att_kernel, S, H)
    out_flat, att = pl.pallas_call(
        kernel,
        out_shape=(
            jax.ShapeDtypeStruct((B, SH), x.dtype),
            jax.ShapeDtypeStruct((B, S), x.dtype),
        ),
        grid_spec=pltpu.PrefetchScalarGridSpec(
            num_scalar_prefetch=0,
            grid=grid,
            in_specs=[
                pl.BlockSpec((tb, SH), lambda i: (i, 0)),   # x, lane-dense blocks
                pl.BlockSpec((1, SH), lambda i: (0, 0)),    # tiled att_weights
                pl.BlockSpec((1, S), lambda i: (0, 0)),     # att_bias
            ],
            out_specs=[
                pl.BlockSpec((tb, SH), lambda i: (i, 0)),   # output, lane-dense
                pl.BlockSpec((tb, S), lambda i: (i, 0)),    # attention weights
            ],
        ),
        compiler_params=pltpu.CompilerParams(
            dimension_semantics=("parallel",),
            vmem_limit_bytes=vmem_limit,
        ),
    )(x_flat, w_tiled, bias)

    out = out_flat.reshape(B, S, H)
    if not return_sequence:
        return jnp.sum(out, axis=1)
    return out, att.reshape(B, S, 1)


def reference(x, att_weights, att_bias):
    e = jnp.tanh(
        jnp.matmul(x, att_weights, precision=jax.lax.Precision.HIGHEST) + att_bias
    )
    att = jax.nn.softmax(e, axis=1)
    return x * att, att


if __name__ == "__main__":
    # Module config: hidden_size=32, seq_len=8, bidirectional=False,
    # return_sequence=True  ->  att_weights: (32, 1), att_bias: (8, 1)
    B, S, H = 2, 8, 32
    key = jax.random.PRNGKey(0)
    kx, kw = jax.random.split(key)

    x = jax.random.normal(kx, (B, S, H), dtype=jnp.float32)
    # init.normal_(att_weights, std=0.001); init.constant_(att_bias, 0)
    att_weights = 0.001 * jax.random.normal(kw, (H, 1), dtype=jnp.float32)
    att_bias = jnp.zeros((S, 1), dtype=jnp.float32)

    out, att = simp_att_layer(x, att_weights, att_bias)
    jax.block_until_ready((out, att))

    ref_out, ref_att = reference(x, att_weights, att_bias)
    # f32 VPU projection + exact softmax division -> f32-level tolerances.
    assert jnp.allclose(out, ref_out, atol=1e-5, rtol=1e-5), \
        float(jnp.max(jnp.abs(out - ref_out)))
    assert jnp.allclose(att, ref_att, atol=1e-5, rtol=1e-5), \
        float(jnp.max(jnp.abs(att - ref_att)))

    print("KERNEL_OK")
</pallas_src>

<mosaic_0001>
module attributes {stable_mosaic.version = 11 : i64} {
  func.func @_simp_att_kernel(%arg0: i32, %arg1: memref<2x256xf32, #tpu.memory_space<vmem>>, %arg2: memref<1x256xf32, #tpu.memory_space<vmem>>, %arg3: memref<1x8xf32, #tpu.memory_space<vmem>>, %arg4: memref<2x256xf32, #tpu.memory_space<vmem>>, %arg5: memref<2x8xf32, #tpu.memory_space<vmem>>) attributes {dimension_semantics = [#tpu.dimension_semantics<parallel>], iteration_bounds = array<i64: 1>, scalar_prefetch = 0 : i64, scratch_operands = 0 : i64, tpu.core_type = #tpu.core_type<tc>, window_params = [{transform_indices = @transform_0, window_bounds = array<i64: 2, 256>}, {pipeline_mode = #tpu.pipeline_mode<synchronous>, transform_indices = @transform_1, window_bounds = array<i64: 1, 256>}, {pipeline_mode = #tpu.pipeline_mode<synchronous>, transform_indices = @transform_2, window_bounds = array<i64: 1, 8>}, {transform_indices = @transform_3, window_bounds = array<i64: 2, 256>}, {transform_indices = @transform_4, window_bounds = array<i64: 2, 8>}]} {
    %c0 = arith.constant 0 : index
    %c0_0 = arith.constant 0 : index
    %0 = vector.load %arg1[%c0, %c0_0] : memref<2x256xf32, #tpu.memory_space<vmem>>, vector<2x256xf32>
    %c0_1 = arith.constant 0 : index
    %c0_2 = arith.constant 0 : index
    %1 = vector.load %arg2[%c0_1, %c0_2] : memref<1x256xf32, #tpu.memory_space<vmem>>, vector<1x256xf32>
    %2 = vector.broadcast %1 : vector<1x256xf32> to vector<2x256xf32>
    %3 = arith.mulf %0, %2 : vector<2x256xf32>
    %4 = vector.shape_cast %3 : vector<2x256xf32> to vector<2x8x32xf32>
    %cst = arith.constant dense<0.000000e+00> : vector<2x8xf32>
    %5 = vector.multi_reduction <add>, %4, %cst [2] : vector<2x8x32xf32> to vector<2x8xf32>
    %c0_3 = arith.constant 0 : index
    %c0_4 = arith.constant 0 : index
    %6 = vector.load %arg3[%c0_3, %c0_4] : memref<1x8xf32, #tpu.memory_space<vmem>>, vector<1x8xf32>
    %7 = vector.broadcast %6 : vector<1x8xf32> to vector<2x8xf32>
    %8 = arith.addf %5, %7 : vector<2x8xf32>
    %9 = math.tanh %8 : vector<2x8xf32>
    %cst_5 = arith.constant dense<0xFF800000> : vector<2xf32>
    %10 = vector.multi_reduction <maximumf>, %9, %cst_5 [1] : vector<2x8xf32> to vector<2xf32>
    %11 = vector.shape_cast %10 : vector<2xf32> to vector<2x1xf32>
    %12 = vector.broadcast %11 : vector<2x1xf32> to vector<2x8xf32>
    %13 = arith.subf %9, %12 : vector<2x8xf32>
    %14 = math.exp %13 : vector<2x8xf32>
    %cst_6 = arith.constant dense<0.000000e+00> : vector<2xf32>
    %15 = vector.multi_reduction <add>, %14, %cst_6 [1] : vector<2x8xf32> to vector<2xf32>
    %16 = vector.shape_cast %15 : vector<2xf32> to vector<2x1xf32>
    %17 = vector.broadcast %16 : vector<2x1xf32> to vector<2x8xf32>
    %18 = arith.divf %14, %17 : vector<2x8xf32>
    %19 = vector.shape_cast %18 : vector<2x8xf32> to vector<2x8x1xf32>
    %20 = vector.shape_cast %19 : vector<2x8x1xf32> to vector<2x8x1xf32>
    %21 = vector.broadcast %20 : vector<2x8x1xf32> to vector<2x8x32xf32>
    %22 = vector.shape_cast %21 : vector<2x8x32xf32> to vector<2x256xf32>
    %23 = arith.mulf %0, %22 : vector<2x256xf32>
    %c0_7 = arith.constant 0 : index
    %c0_8 = arith.constant 0 : index
    %24 = vector.load %arg4[%c0_7, %c0_8] : memref<2x256xf32, #tpu.memory_space<vmem>>, vector<2x256xf32>
    tpu.vector_store %arg4[%c0_7, %c0_8], %23 {strides = array<i32>} : memref<2x256xf32, #tpu.memory_space<vmem>>, vector<2x256xf32>,
    %c0_9 = arith.constant 0 : index
    %c0_10 = arith.constant 0 : index
    %25 = vector.load %arg5[%c0_9, %c0_10] : memref<2x8xf32, #tpu.memory_space<vmem>>, vector<2x8xf32>
    tpu.vector_store %arg5[%c0_9, %c0_10], %18 {strides = array<i32>} : memref<2x8xf32, #tpu.memory_space<vmem>>, vector<2x8xf32>,
    return
  }
  func.func @transform_0(%arg0: i32) -> (i32, i32) {
    %c0_i32 = arith.constant 0 : i32
    %c0_i32_0 = arith.constant 0 : i32
    return %arg0, %c0_i32 : i32, i32
  }
  func.func @transform_1(%arg0: i32) -> (i32, i32) {
    %c0_i32 = arith.constant 0 : i32
    %c0_i32_0 = arith.constant 0 : i32
    %c0_i32_1 = arith.constant 0 : i32
    return %c0_i32, %c0_i32_0 : i32, i32
  }
  func.func @transform_2(%arg0: i32) -> (i32, i32) {
    %c0_i32 = arith.constant 0 : i32
    %c0_i32_0 = arith.constant 0 : i32
    %c0_i32_1 = arith.constant 0 : i32
    return %c0_i32, %c0_i32_0 : i32, i32
  }
  func.func @transform_3(%arg0: i32) -> (i32, i32) {
    %c0_i32 = arith.constant 0 : i32
    %c0_i32_0 = arith.constant 0 : i32
    return %arg0, %c0_i32 : i32, i32
  }
  func.func @transform_4(%arg0: i32) -> (i32, i32) {
    %c0_i32 = arith.constant 0 : i32
    %c0_i32_0 = arith.constant 0 : i32
    return %arg0, %c0_i32 : i32, i32
  }
}

</mosaic_0001>

<llo_original>
// kernel: tpu_custom_call.1
$region0: #{tpu_custom_call.1}
  #allocation0 [shape = 'u32[]', space=smem, size = 0x4, offset = 0x4, fixed_abs, tag = 'smem constant byte address 0x4 - core index']
  #allocation1 [shape = 'u32[72,128]{1,0:T(1,128)}', space=vmem, size = 0x9000, scoped, tag = 'internal scratch']
  %s0 = inlined_call_operand.hbm [shape: f32[2,256], index: 0, kind: input, shape index: {}]
  %s1 = inlined_call_operand.hbm [shape: f32[1,256], index: 1, kind: input, shape index: {}]
  %s2 = inlined_call_operand.vmem [shape: f32[1,8], index: 2, kind: input, shape index: {}]
  %s3 = inlined_call_operand.hbm [shape: f32[2,256], index: 3, kind: output, shape index: {0}]
  %s4 = inlined_call_operand.hbm [shape: f32[2,8], index: 4, kind: output, shape index: {1}]
  %5 = xla_tuple %s3, %s4
  %s6 = sld [smem:[#allocation0]]
  $region38: #{tpu_custom_call.1} parent=0
    _
  %s8 = ssub.s32 1, %s6
  %s9 = scalar_select 0, %s8, %s6
  $region1: #{tpu_custom_call.1} parent=0
    #allocation2 [shape = 'u8[2048]{0}', space=vmem, size = 0x800, scoped, tag = 'input window, operand 0, single buffered']
    #allocation3 [shape = 's32[1]{0}', space=sflag, size = 0x4, scoped, tag = 'scoped memory for tpu_custom_call.1']
    #allocation4 [shape = 's32[1]{0}', space=sflag, size = 0x4, scoped, tag = 'scoped memory for tpu_custom_call.1']
    #allocation5 [shape = 'u8[1024]{0}', space=vmem, size = 0x400, scoped, tag = 'input window, operand 1, single buffered']
    #allocation6 [shape = 's32[1]{0}', space=sflag, size = 0x4, scoped, tag = 'scoped memory for tpu_custom_call.1']
    #allocation7 [shape = 'u8[2048]{0}', space=vmem, size = 0x800, scoped, tag = 'output window, operand 0, single buffered']
    #allocation8 [shape = 'u8[1024]{0}', space=vmem, size = 0x400, scoped, tag = 'output window, operand 1, single buffered']
    #allocation9 [shape = 's32[1]{0}', space=sflag, size = 0x4, scoped, tag = 'scoped memory for tpu_custom_call.1']
    %10 = vsyncpa [#allocation3], 0
    %11 = vsyncpa [#allocation6], 0
    %12 = vsyncpa [#allocation4], 0
    %13 = vsyncpa [#allocation9], 0
    // Predicated region
    $region2: #{tpu_custom_call.1} parent=1 // pred_check
      _
    $region3: #{tpu_custom_call.1} parent=1 // pred_check_branch
      %15 = sbr.rel (0) target = $region5
    $region4: #{tpu_custom_call.1} parent=1 // pred_region
      %17 = vsyncadd [#allocation3], 0
      %s19 = sshll.u32 %s0, 4
      %s20 = int_to_ptr.hbm [resolvable:$true] %s19
      %s21 = sshll.u32 [#allocation2], 4
      %s22 = int_to_ptr.vmem [resolvable:$true] %s21
      %24 = dma.hbm_to_vmem [thread:$0]  %s20, 64, %s22, [#allocation3]
    $region5: #{tpu_custom_call.1} parent=1 // pred_fallthru
      _
    // Predicated region
    $region6: #{tpu_custom_call.1} parent=1 // pred_check
      _
    $region7: #{tpu_custom_call.1} parent=1 // pred_check_branch
      %26 = sbr.rel (0) target = $region9
    $region8: #{tpu_custom_call.1} parent=1 // pred_region
      %28 = vsyncadd [#allocation6], 0
      %s30 = sshll.u32 %s1, 4
      %s31 = int_to_ptr.hbm [resolvable:$true] %s30
      %s32 = sshll.u32 [#allocation5], 4
      %s33 = int_to_ptr.vmem [resolvable:$true] %s32
      %35 = dma.hbm_to_vmem [thread:$0]  %s31, 32, %s33, [#allocation6]
    $region9: #{tpu_custom_call.1} parent=1 // pred_fallthru
      _
    // Predicated region
    $region10: #{tpu_custom_call.1} parent=1 // pred_check
      _
    $region11: #{tpu_custom_call.1} parent=1 // pred_check_branch
      %37 = sbr.rel (0) target = $region13
    $region12: #{tpu_custom_call.1} parent=1 // pred_region
      _
    $region13: #{tpu_custom_call.1} parent=1 // pred_fallthru
      _
    // Predicated region
    $region14: #{tpu_custom_call.1} parent=1 // pred_check
      _
    $region15: #{tpu_custom_call.1} parent=1 // pred_check_branch
      %39 = sbr.rel (0) target = $region17
    $region16: #{tpu_custom_call.1} parent=1 // pred_region
      %41 = dma.done [#allocation3], 64
    $region17: #{tpu_custom_call.1} parent=1 // pred_fallthru
      _
    // Predicated region
    $region18: #{tpu_custom_call.1} parent=1 // pred_check
      _
    $region19: #{tpu_custom_call.1} parent=1 // pred_check_branch
      %43 = sbr.rel (0) target = $region21
    $region20: #{tpu_custom_call.1} parent=1 // pred_region
      %45 = dma.done [#allocation6], 32
    $region21: #{tpu_custom_call.1} parent=1 // pred_fallthru
      _
    %v46 = vld [vmem:[#allocation2] sm:$0xf]
    %v47 = vld [vmem:[#allocation5] sm:$0x3]
    %v49 = vperm.slane %v47, 0
    %v50 = vperm.slane %v47, 1
    %v51 = vrot.slane %v50, 6
    %vm52 = vcmask 1041408
    %v53 = vsel %vm52, %v49, %v51
    %v55 = vmul.f32 %v46, %v53
    %v57 = vrot.slane %v55, 2
    %59 = vrot.lane.b32.xlu0 %v55, 96
    %v60 = vpop.permute.xlu0 %59
    %v61 = vrot.slane %v60, 2
    %63 = vrot.lane.b32.xlu0 %v55, 64
    %v64 = vpop.permute.xlu0 %63
    %v65 = vrot.slane %v64, 2
    %67 = vrot.lane.b32.xlu0 %v55, 32
    %v68 = vpop.permute.xlu0 %67
    %v69 = vrot.slane %v68, 2
    %v74 = vrot.slane %v60, 4
    %vm75 = vcmask 1047556
    %v76 = vsel %vm75, %v74, %v55
    %v78 = vunpack.c.l.s4 1934713408
    %v79 = vunpack.c.0.s8 %v78
    %v80 = vperm.slane %v76, %v79
    %v81 = vrot.slane %v80, 4
    %v82 = vsel %vm75, 0.0, %v81
    %v83 = vrot.slane %v68, 4
    %v84 = vsel %vm75, %v83, %v64
    %v86 = vunpack.c.l.s4 1934713408
    %v87 = vunpack.c.0.s8 %v86
    %v88 = vperm.slane %v84, %v87
    %v89 = vrot.slane %v88, 4
    %v90 = vsel %vm75, 0.0, %v89
    %v91 = vrot.slane %v61, 4
    %v92 = vsel %vm75, %v91, %v57
    %v94 = vunpack.c.l.s4 1934713408
    %v95 = vunpack.c.0.s8 %v94
    %v96 = vperm.slane %v92, %v95
    %v97 = vrot.slane %v96, 4
    %v98 = vsel %vm75, 0.0, %v97
    %v99 = vrot.slane %v69, 4
    %v100 = vsel %vm75, %v99, %v65
    %v102 = vunpack.c.l.s4 1934713408
    %v103 = vunpack.c.0.s8 %v102
    %v104 = vperm.slane %v100, %v103
    %v105 = vrot.slane %v104, 4
    %v106 = vsel %vm75, 0.0, %v105
    %115 = vst [vmem:[#allocation1] ss:$4 sm:$0xff] %v80
    %s116 = scalar_lea.vmem [#allocation1], 1
    %117 = vst [vmem:[%s116] ss:$4 sm:$0xff] %v88
    %s118 = scalar_lea.vmem [#allocation1], 2
    %119 = vst [vmem:[%s118] ss:$4 sm:$0xff] %v96
    %s120 = scalar_lea.vmem [#allocation1], 3
    %121 = vst [vmem:[%s120] ss:$4 sm:$0xff] %v104
    %v122 = vld.sshfl [vmem:[#allocation1] sm:$0xff pattern:$0x73625140]
    %s123 = scalar_lea.vmem [#allocation1], 32
    %124 = vst [vmem:[%s123] ss:$4 sm:$0xff] %v82
    %s125 = scalar_lea.vmem [#allocation1], 33
    %126 = vst [vmem:[%s125] ss:$4 sm:$0xff] %v90
    %s127 = scalar_lea.vmem [#allocation1], 34
    %128 = vst [vmem:[%s127] ss:$4 sm:$0xff] %v98
    %s129 = scalar_lea.vmem [#allocation1], 35
    %130 = vst [vmem:[%s129] ss:$4 sm:$0xff] %v106
    %v131 = vld.sshfl [vmem:[#allocation1 + $0x20] sm:$0xff pattern:$0x73625140]
    %vm134 = vcmask 261120
    %v135 = vsel %vm134, %v122, 0.0
    %136 = vadd.xlane.f32.xlu0 %v135
    %v137 = vpop.xlane.xlu0 %136
    %v138 = vsel %vm134, %v131, 0.0
    %139 = vadd.xlane.f32.xlu0 %v138
    %v140 = vpop.xlane.xlu0 %139
    %v141 = vld [vmem:[%s2] sm:$0x1]
    %v143 = vperm.slane %v141, 0
    %v144 = vlaneseq
    %v145 = vshrl.u32 %v144, 7
    %147 = vset.pattern.permute.xlu0 %v145
    %148 = vperm.xlu0 %147, %v143
    %v149 = vpop.permute.xlu0 %148
    %v151 = vadd.f32 %v137, %v149
    %v152 = vadd.f32 %v140, %v149
    %v153 = vtanh.pop %v151
    %v154 = vtanh.pop %v152
    %157 = vset.pattern.permute.xlu0 0
    %158 = vperm.xlu0 %157, %v153
    %v159 = vpop.permute.xlu0 %158
    %160 = vset.pattern.permute.xlu0 0
    %161 = vperm.xlu0 %160, %v154
    %v162 = vpop.permute.xlu0 %161
    %v163 = vlaneseq
    %v164 = vand.u32 %v163, 127
    %v165 = vperm.slane %v159, %v164
    %v166 = vperm.slane %v162, %v164
    %vm167 = vcmask 1041409
    %v168 = vsel %vm167, %v166, %v165
    %vm170 = vcmask 58368
    %v171 = vsel %vm170, %v168, -inf
    %172 = vmax.xlane.f32.xlu0 %v171
    %v173 = vpop.xlane.xlu0 %172
    %v175 = vperm.slane %v173, 0
    %v176 = vperm.slane %v173, 1
    %v179 = vsub.f32 %v153, %v175
    %v180 = vsub.f32 %v154, %v176
    %v181 = vmul.f32 %v179, 1.442695
    %v182 = vpow.pop %v181
    %v183 = vmul.f32 %v180, 1.442695
    %v184 = vpow.pop %v183
    %187 = vset.pattern.permute.xlu0 0
    %188 = vperm.xlu0 %187, %v182
    %v189 = vpop.permute.xlu0 %188
    %190 = vset.pattern.permute.xlu0 0
    %191 = vperm.xlu0 %190, %v184
    %v192 = vpop.permute.xlu0 %191
    %v193 = vperm.slane %v189, %v164
    %v194 = vperm.slane %v192, %v164
    %v195 = vsel %vm167, %v194, %v193
    %v197 = vsel %vm170, %v195, 0.0
    %198 = vadd.xlane.f32.xlu0 %v197
    %v199 = vpop.xlane.xlu0 %198
    %v201 = vperm.slane %v199, 0
    %v202 = vperm.slane %v199, 1
    %v205 = vrcp.pop %v201
    %v206 = vmul.f32 %v201, %v205
    %v207 = vsub.f32 1.0, %v206
    %v208 = vmul.f32 %v205, %v207
    %v209 = vadd.f32 %v205, %v208
    %vm210 = vweird.f32 %v201
    %vm211 = vweird.f32 %v205
    %vm212 = vmor %vm210, %vm211
    %v213 = vsel %vm212, %v205, %v209
    %v214 = vand.u32 2147483647, %v201
    %vm215 = vcmp.eq.f32.partialorder %v214, 8.507059e+37
    %v216 = vand.u32 %v201, 2147483648
    %v217 = vor.u32 1.1754944e-38, %v216
    %v218 = vsel %vm215, %v217, %v213
    %v219 = vmul.f32 %v182, %v218
    %v220 = vrcp.pop %v202
    %v221 = vmul.f32 %v202, %v220
    %v222 = vsub.f32 1.0, %v221
    %v223 = vmul.f32 %v220, %v222
    %v224 = vadd.f32 %v220, %v223
    %vm225 = vweird.f32 %v202
    %vm226 = vweird.f32 %v220
    %vm227 = vmor %vm225, %vm226
    %v228 = vsel %vm227, %v220, %v224
    %v229 = vand.u32 2147483647, %v202
    %vm230 = vcmp.eq.f32.partialorder %v229, 8.507059e+37
    %v231 = vand.u32 %v202, 2147483648
    %v232 = vor.u32 1.1754944e-38, %v231
    %v233 = vsel %vm230, %v232, %v228
    %v234 = vmul.f32 %v184, %v233
    %236 = vset.pattern.permute.xlu0 0
    %237 = vperm.xlu0 %236, %v219
    %v238 = vpop.permute.xlu0 %237
    %241 = vset.pattern.permute.xlu0 0
    %242 = vperm.xlu0 %241, %v234
    %v243 = vpop.permute.xlu0 %242
    %v245 = vrot.slane %v238, 4
    %v246 = vsel %vm75, 0.0, %v245
    %v248 = vunpack.c.l.s4 1983009808
    %v249 = vunpack.c.0.s8 %v248
    %v250 = vperm.slane %v238, %v249
    %v252 = vunpack.c.l.s4 1983009808
    %v253 = vunpack.c.0.s8 %v252
    %v254 = vperm.slane %v246, %v253
    %v255 = vrot.slane %v243, 4
    %v256 = vsel %vm75, 0.0, %v255
    %v258 = vunpack.c.l.s4 1983009808
    %v259 = vunpack.c.0.s8 %v258
    %v260 = vperm.slane %v243, %v259
    %v262 = vunpack.c.l.s4 1983009808
    %v263 = vunpack.c.0.s8 %v262
    %v264 = vperm.slane %v256, %v263
    %v265 = vrot.slane %v260, 4
    %v266 = vsel %vm75, %v265, %v250
    %v267 = vrot.slane %v250, 4
    %v268 = vsel %vm75, %v260, %v267
    %v270 = vunpack.c.l.s4 1934713408
    %v271 = vunpack.c.0.s8 %v270
    %v272 = vperm.slane %v266, %v271
    %v274 = vunpack.c.l.s4 1934713408
    %v275 = vunpack.c.0.s8 %v274
    %v276 = vperm.slane %v268, %v275
    %v277 = vrot.slane %v264, 4
    %v278 = vsel %vm75, %v277, %v254
    %v279 = vrot.slane %v254, 4
    %v280 = vsel %vm75, %v264, %v279
    %v282 = vunpack.c.l.s4 1934713408
    %v283 = vunpack.c.0.s8 %v282
    %v284 = vperm.slane %v278, %v283
    %v286 = vunpack.c.l.s4 1934713408
    %v287 = vunpack.c.0.s8 %v286
    %v288 = vperm.slane %v280, %v287
    %v289 = vrot.slane %v272, 4
    %v290 = vsel %vm75, 0.0, %v289
    %v291 = vrot.slane %v276, 4
    %v292 = vsel %vm75, 0.0, %v291
    %v293 = vrot.slane %v284, 4
    %v294 = vsel %vm75, 0.0, %v293
    %v295 = vrot.slane %v288, 4
    %v296 = vsel %vm75, 0.0, %v295
    %298 = vrot.lane.b32.xlu0 %v290, 32
    %v299 = vpop.permute.xlu0 %298
    %302 = vrot.lane.b32.xlu0 %v276, 64
    %v303 = vpop.permute.xlu0 %302
    %306 = vrot.lane.b32.xlu0 %v292, 96
    %v307 = vpop.permute.xlu0 %306
    %310 = vrot.lane.b32.xlu0 %v294, 32
    %v311 = vpop.permute.xlu0 %310
    %314 = vrot.lane.b32.xlu0 %v288, 64
    %v315 = vpop.permute.xlu0 %314
    %318 = vrot.lane.b32.xlu0 %v296, 96
    %v319 = vpop.permute.xlu0 %318
    %v321 = vsel %vm134, %v272, %v299
    %vm322 = vcmask 523264
    %v323 = vsel %vm322, %v321, %v303
    %vm324 = vcmask 785408
    %v325 = vsel %vm324, %v323, %v307
    %v326 = vsel %vm134, %v284, %v311
    %v327 = vsel %vm322, %v326, %v315
    %v328 = vsel %vm324, %v327, %v319
    %v331 = vrot.slane %v328, 6
    %v332 = vsel %vm52, %v325, %v331
    %v334 = vmul.f32 %v46, %v332
    %335 = vst [vmem:[#allocation7] sm:$0xf] %v334
    %v336 = vperm.slane %v238, %v164
    %v337 = vperm.slane %v243, %v164
    %v338 = vsel %vm167, %v337, %v336
    %340 = vst.msk [vmem:[#allocation8] sm:$0x3] %vm170, %v338
    // Predicated region
    $region22: #{tpu_custom_call.1} parent=1 // pred_check
      _
    $region23: #{tpu_custom_call.1} parent=1 // pred_check_branch
      %342 = sbr.rel (0) target = $region25
    $region24: #{tpu_custom_call.1} parent=1 // pred_region
      %344 = vsyncadd [#allocation4], 0
      %s346 = sshll.u32 [#allocation7], 4
      %s347 = int_to_ptr.vmem [resolvable:$true] %s346
      %s348 = sshll.u32 %s3, 4
      %s349 = int_to_ptr.hbm [resolvable:$true] %s348
      %351 = dma.vmem_to_hbm [thread:$0]  %s347, 64, %s349, [#allocation4]
    $region25: #{tpu_custom_call.1} parent=1 // pred_fallthru
      _
    // Predicated region
    $region26: #{tpu_custom_call.1} parent=1 // pred_check
      _
    $region27: #{tpu_custom_call.1} parent=1 // pred_check_branch
      %353 = sbr.rel (0) target = $region29
    $region28: #{tpu_custom_call.1} parent=1 // pred_region
      %355 = vsyncadd [#allocation9], 0
      %s357 = sshll.u32 [#allocation8], 4
      %s358 = int_to_ptr.vmem [resolvable:$true] %s357
      %s359 = sshll.u32 %s4, 4
      %s360 = int_to_ptr.hbm [resolvable:$true] %s359
      %362 = dma.vmem_to_hbm [thread:$0]  %s358, 32, %s360, [#allocation9]
    $region29: #{tpu_custom_call.1} parent=1 // pred_fallthru
      _
    // Predicated region
    $region30: #{tpu_custom_call.1} parent=1 // pred_check
      _
    $region31: #{tpu_custom_call.1} parent=1 // pred_check_branch
      %364 = sbr.rel (0) target = $region33
    $region32: #{tpu_custom_call.1} parent=1 // pred_region
      %366 = dma.done [#allocation4], 64
    $region33: #{tpu_custom_call.1} parent=1 // pred_fallthru
      _
    // Predicated region
    $region34: #{tpu_custom_call.1} parent=1 // pred_check
      _
    $region35: #{tpu_custom_call.1} parent=1 // pred_check_branch
      %368 = sbr.rel (0) target = $region37
    $region36: #{tpu_custom_call.1} parent=1 // pred_region
      %370 = dma.done [#allocation9], 32
    $region37: #{tpu_custom_call.1} parent=1 // pred_fallthru
      _
    %371 = vsyncpa [#allocation3], 1
    %372 = vsyncpa [#allocation6], 1
    %373 = vsyncpa [#allocation4], 1
    %374 = vsyncpa [#allocation9], 1

</llo_original>
